<compile_context>
chip_gen: v6e
topology: v6e:2x2x1
jax: 0.10.0
libtpu: 0.0.40
codegen_flags: <defaults>
</compile_context>

<pallas_src>
import functools

import jax
import jax.numpy as jnp
from jax.experimental import pallas as pl
from jax.experimental.pallas import tpu as pltpu

C_IN = 2
C_OUT = 64
K = 7          # conv kernel size
CONV_STRIDE = 2
CONV_PAD = 3
POOL_K = 3
POOL_STRIDE = 2
POOL_PAD = 1


def _compressor_kernel(pm1_ref, p0_ref, pp1_ref, w_ref, b_ref, o_ref, *, l_conv, tile):
    # pm1/p0/pp1: (14, T) im2col patches for conv positions 2j-1 / 2j / 2j+1
    # w_ref: (64, 14)   b_ref: (64, 1)   o_ref: (64, T)
    t = pl.program_id(1)
    w = w_ref[...]
    a = jnp.dot(w, pm1_ref[...], preferred_element_type=jnp.float32)   # conv[2j-1] (no bias)
    m = jnp.dot(w, p0_ref[...], preferred_element_type=jnp.float32)    # conv[2j]
    c = jnp.dot(w, pp1_ref[...], preferred_element_type=jnp.float32)   # conv[2j+1]

    # MaxPool1d(padding=1) pads the conv output with -inf: mask out-of-range side taps.
    j = t * tile + jax.lax.broadcasted_iota(jnp.int32, a.shape, 1)      # global pooled index
    a = jnp.where(j >= 1, a, -jnp.inf)                  # conv[-1] is pool padding
    c = jnp.where(2 * j + 1 < l_conv, c, -jnp.inf)      # conv[l_conv] is pool padding

    # Dropout1d(0.3) is identity in eval mode.
    # TODO(synk): training-mode channel dropout (RNG mask) not implemented; eval semantics used.
    pooled = jnp.maximum(jnp.maximum(a, m), c) + b_ref[...]             # bias folded in once
    # (Optional: emit bf16 here to halve the store-bound HBM traffic if downstream allows.)
    o_ref[...] = pooled.astype(o_ref.dtype)


def compressor_forward(x, weight, bias, *, tile_max=2048):
    """x: (B, 2, S, L); weight: (64, 2, 7); bias: (64,). Returns (B, 64, L_pool) float32."""
    x2 = x[:, :, 0].astype(jnp.float32)                      # (B, 2, L) -- matches torch x[:, :, 0]
    B, _, L = x2.shape
    l_conv = (L + 2 * CONV_PAD - K) // CONV_STRIDE + 1
    l_pool = (l_conv + 2 * POOL_PAD - POOL_K) // POOL_STRIDE + 1

    if l_pool <= tile_max:
        tile, n_tiles = l_pool, 1            # single tile: block == full length axis
    else:
        tile = tile_max                      # multiple of 128 -> lane-aligned blocks
        n_tiles = (l_pool + tile - 1) // tile
    lp_pad = tile * n_tiles

    # Zero-pad the length axis: conv padding (3) plus 2 extra on the left for the d=-1 tap
    # and enough on the right so every strided gather below stays in bounds.  The extra pad
    # only feeds conv positions that the kernel masks to -inf (or store-masked tail lanes).
    left = CONV_PAD + 2
    total = 4 * lp_pad + 8
    xp = jnp.pad(x2, ((0, 0), (0, 0), (left, total - left - L)))        # (B, 2, total)

    # Im2col (cheap: only 2 input channels): P_d[b, k*2+c, j] = x_padded[b, c, 2*(2j+d) + k].
    def build_patches(d):
        rows = []
        for k in range(K):
            for ci in range(C_IN):
                s = 2 * d + k + 2
                rows.append(xp[:, ci, s:s + 4 * (lp_pad - 1) + 1:4])    # (B, lp_pad)
        return jnp.stack(rows, axis=1)                                  # (B, 14, lp_pad)

    pm1, p0, pp1 = build_patches(-1), build_patches(0), build_patches(1)

    # w2[o, k*2+c] = weight[o, c, k]  -> single (64, 14) LHS for the contraction-14 matmul.
    w2 = jnp.transpose(weight, (0, 2, 1)).reshape(C_OUT, K * C_IN).astype(jnp.float32)
    b2 = bias.reshape(C_OUT, 1).astype(jnp.float32)

    kernel = functools.partial(_compressor_kernel, l_conv=l_conv, tile=tile)
    patch_spec = pl.BlockSpec((None, K * C_IN, tile), lambda b, t: (b, 0, t))

    return pl.pallas_call(
        kernel,
        out_shape=jax.ShapeDtypeStruct((B, C_OUT, l_pool), jnp.float32),
        grid=(B, n_tiles),
        in_specs=[
            patch_spec, patch_spec, patch_spec,
            pl.BlockSpec((C_OUT, K * C_IN), lambda b, t: (0, 0)),
            pl.BlockSpec((C_OUT, 1), lambda b, t: (0, 0)),
        ],
        out_specs=pl.BlockSpec((None, C_OUT, tile), lambda b, t: (b, 0, t)),
        compiler_params=pltpu.CompilerParams(
            dimension_semantics=("parallel", "parallel")),
    )(pm1, p0, pp1, w2, b2)                  # already (B, 64, L_pool) NCL -- no transpose


def _reference_forward(x, weight, bias):
    """Pure-JAX reference (eval mode: dropout is identity)."""
    x2d = x[:, :, 0]
    conv = jax.lax.conv_general_dilated(
        x2d, weight, window_strides=(CONV_STRIDE,), padding=[(CONV_PAD, CONV_PAD)],
        dimension_numbers=("NCH", "OIH", "NCH"))
    conv = conv + bias[None, :, None]
    pooled = jax.lax.reduce_window(
        conv, -jnp.inf, jax.lax.max,
        window_dimensions=(1, 1, POOL_K),
        window_strides=(1, 1, POOL_STRIDE),
        padding=[(0, 0), (0, 0), (POOL_PAD, POOL_PAD)])
    return pooled


if __name__ == "__main__":
    key = jax.random.PRNGKey(0)
    k_w, k_b, k_x = jax.random.split(key, 3)

    # Deterministic synthetic parameters (shapes from nn.Conv1d(2, 64, 7)).
    weight = 0.1 * jax.random.normal(k_w, (C_OUT, C_IN, K), dtype=jnp.float32)
    bias = 0.1 * jax.random.normal(k_b, (C_OUT,), dtype=jnp.float32)

    # Input: (B, 2, S, L); forward slices dim 2 at index 0.
    B, S, L = 2, 3, 16
    x = jax.random.normal(k_x, (B, C_IN, S, L), dtype=jnp.float32)

    out = jax.block_until_ready(compressor_forward(x, weight, bias))

    ref = _reference_forward(x, weight, bias)
    assert out.shape == ref.shape, (out.shape, ref.shape)
    assert jnp.allclose(out, ref, rtol=1e-5, atol=1e-5), float(jnp.max(jnp.abs(out - ref)))

    print("KERNEL_OK")
</pallas_src>

<mosaic_0001>
module attributes {stable_mosaic.version = 11 : i64} {
  func.func @_compressor_kernel(%arg0: i32, %arg1: i32, %arg2: memref<1x14x4xf32, #tpu.memory_space<vmem>>, %arg3: memref<1x14x4xf32, #tpu.memory_space<vmem>>, %arg4: memref<1x14x4xf32, #tpu.memory_space<vmem>>, %arg5: memref<64x14xf32, #tpu.memory_space<vmem>>, %arg6: memref<64x1xf32, #tpu.memory_space<vmem>>, %arg7: memref<1x64x4xf32, #tpu.memory_space<vmem>>) attributes {dimension_semantics = [#tpu.dimension_semantics<parallel>, #tpu.dimension_semantics<parallel>], iteration_bounds = array<i64: 2, 1>, scalar_prefetch = 0 : i64, scratch_operands = 0 : i64, tpu.core_type = #tpu.core_type<tc>, window_params = [{transform_indices = @transform_0, window_bounds = array<i64: 1, 14, 4>}, {transform_indices = @transform_1, window_bounds = array<i64: 1, 14, 4>}, {transform_indices = @transform_2, window_bounds = array<i64: 1, 14, 4>}, {pipeline_mode = #tpu.pipeline_mode<synchronous>, transform_indices = @transform_3, window_bounds = array<i64: 64, 14>}, {pipeline_mode = #tpu.pipeline_mode<synchronous>, transform_indices = @transform_4, window_bounds = array<i64: 64, 1>}, {transform_indices = @transform_5, window_bounds = array<i64: 1, 64, 4>}]} {
    %c0 = arith.constant 0 : index
    %c0_0 = arith.constant 0 : index
    %0 = vector.load %arg5[%c0, %c0_0] : memref<64x14xf32, #tpu.memory_space<vmem>>, vector<64x14xf32>
    %c0_1 = arith.constant 0 : index
    %c0_2 = arith.constant 0 : index
    %c0_3 = arith.constant 0 : index
    %1 = vector.load %arg2[%c0_1, %c0_2, %c0_3] : memref<1x14x4xf32, #tpu.memory_space<vmem>>, vector<1x14x4xf32>
    %2 = vector.shape_cast %1 : vector<1x14x4xf32> to vector<14x4xf32>
    %cst = arith.constant dense<0.000000e+00> : vector<64x4xf32>
    %3 = tpu.matmul %0, %2, %cst {dimension_numbers = #tpu.dot_dimension_numbers<[1], [0], [0], [1], [0, 0, 1, 1], [], []>} : vector<64x14xf32>, vector<14x4xf32>, vector<64x4xf32> -> vector<64x4xf32>
    %c0_4 = arith.constant 0 : index
    %c0_5 = arith.constant 0 : index
    %c0_6 = arith.constant 0 : index
    %4 = vector.load %arg3[%c0_4, %c0_5, %c0_6] : memref<1x14x4xf32, #tpu.memory_space<vmem>>, vector<1x14x4xf32>
    %5 = vector.shape_cast %4 : vector<1x14x4xf32> to vector<14x4xf32>
    %cst_7 = arith.constant dense<0.000000e+00> : vector<64x4xf32>
    %6 = tpu.matmul %0, %5, %cst_7 {dimension_numbers = #tpu.dot_dimension_numbers<[1], [0], [0], [1], [0, 0, 1, 1], [], []>} : vector<64x14xf32>, vector<14x4xf32>, vector<64x4xf32> -> vector<64x4xf32>
    %c0_8 = arith.constant 0 : index
    %c0_9 = arith.constant 0 : index
    %c0_10 = arith.constant 0 : index
    %7 = vector.load %arg4[%c0_8, %c0_9, %c0_10] : memref<1x14x4xf32, #tpu.memory_space<vmem>>, vector<1x14x4xf32>
    %8 = vector.shape_cast %7 : vector<1x14x4xf32> to vector<14x4xf32>
    %cst_11 = arith.constant dense<0.000000e+00> : vector<64x4xf32>
    %9 = tpu.matmul %0, %8, %cst_11 {dimension_numbers = #tpu.dot_dimension_numbers<[1], [0], [0], [1], [0, 0, 1, 1], [], []>} : vector<64x14xf32>, vector<14x4xf32>, vector<64x4xf32> -> vector<64x4xf32>
    %c4_i32 = arith.constant 4 : i32
    %10 = arith.muli %arg1, %c4_i32 : i32
    %11 = tpu.iota {dimensions = array<i32: 1>} : vector<64x4xi32>
    %12 = vector.broadcast %10 : i32 to vector<64x4xi32>
    %13 = arith.addi %12, %11 : vector<64x4xi32>
    %c1_i32 = arith.constant 1 : i32
    %14 = vector.broadcast %c1_i32 : i32 to vector<64x4xi32>
    %15 = arith.cmpi sge, %13, %14 : vector<64x4xi32>
    %cst_12 = arith.constant 0xFF800000 : f32
    %16 = vector.broadcast %cst_12 : f32 to vector<64x4xf32>
    %17 = arith.select %15, %3, %16 : vector<64x4xi1>, vector<64x4xf32>
    %c2_i32 = arith.constant 2 : i32
    %18 = vector.broadcast %c2_i32 : i32 to vector<64x4xi32>
    %19 = arith.muli %18, %13 : vector<64x4xi32>
    %c1_i32_13 = arith.constant 1 : i32
    %20 = vector.broadcast %c1_i32_13 : i32 to vector<64x4xi32>
    %21 = arith.addi %19, %20 : vector<64x4xi32>
    %c8_i32 = arith.constant 8 : i32
    %22 = vector.broadcast %c8_i32 : i32 to vector<64x4xi32>
    %23 = arith.cmpi slt, %21, %22 : vector<64x4xi32>
    %cst_14 = arith.constant 0xFF800000 : f32
    %24 = vector.broadcast %cst_14 : f32 to vector<64x4xf32>
    %25 = arith.select %23, %9, %24 : vector<64x4xi1>, vector<64x4xf32>
    %26 = arith.maximumf %17, %6 : vector<64x4xf32>
    %27 = arith.maximumf %26, %25 : vector<64x4xf32>
    %c0_15 = arith.constant 0 : index
    %c0_16 = arith.constant 0 : index
    %28 = vector.load %arg6[%c0_15, %c0_16] : memref<64x1xf32, #tpu.memory_space<vmem>>, vector<64x1xf32>
    %29 = vector.broadcast %28 : vector<64x1xf32> to vector<64x4xf32>
    %30 = arith.addf %27, %29 : vector<64x4xf32>
    %c0_17 = arith.constant 0 : index
    %c0_18 = arith.constant 0 : index
    %c0_19 = arith.constant 0 : index
    %31 = vector.load %arg7[%c0_17, %c0_18, %c0_19] : memref<1x64x4xf32, #tpu.memory_space<vmem>>, vector<1x64x4xf32>
    %32 = vector.shape_cast %31 : vector<1x64x4xf32> to vector<64x4xf32>
    %33 = vector.shape_cast %30 : vector<64x4xf32> to vector<1x64x4xf32>
    tpu.vector_store %arg7[%c0_17, %c0_18, %c0_19], %33 {strides = array<i32>} : memref<1x64x4xf32, #tpu.memory_space<vmem>>, vector<1x64x4xf32>,
    return
  }
  func.func @transform_0(%arg0: i32, %arg1: i32) -> (i32, i32, i32) {
    %c0_i32 = arith.constant 0 : i32
    %c0_i32_0 = arith.constant 0 : i32
    return %arg0, %c0_i32, %arg1 : i32, i32, i32
  }
  func.func @transform_1(%arg0: i32, %arg1: i32) -> (i32, i32, i32) {
    %c0_i32 = arith.constant 0 : i32
    %c0_i32_0 = arith.constant 0 : i32
    return %arg0, %c0_i32, %arg1 : i32, i32, i32
  }
  func.func @transform_2(%arg0: i32, %arg1: i32) -> (i32, i32, i32) {
    %c0_i32 = arith.constant 0 : i32
    %c0_i32_0 = arith.constant 0 : i32
    return %arg0, %c0_i32, %arg1 : i32, i32, i32
  }
  func.func @transform_3(%arg0: i32, %arg1: i32) -> (i32, i32) {
    %c0_i32 = arith.constant 0 : i32
    %c0_i32_0 = arith.constant 0 : i32
    %c0_i32_1 = arith.constant 0 : i32
    return %c0_i32, %c0_i32_0 : i32, i32
  }
  func.func @transform_4(%arg0: i32, %arg1: i32) -> (i32, i32) {
    %c0_i32 = arith.constant 0 : i32
    %c0_i32_0 = arith.constant 0 : i32
    %c0_i32_1 = arith.constant 0 : i32
    return %c0_i32, %c0_i32_0 : i32, i32
  }
  func.func @transform_5(%arg0: i32, %arg1: i32) -> (i32, i32, i32) {
    %c0_i32 = arith.constant 0 : i32
    %c0_i32_0 = arith.constant 0 : i32
    return %arg0, %c0_i32, %arg1 : i32, i32, i32
  }
}

</mosaic_0001>

<llo_original>
// kernel: tpu_custom_call.1
$region0: #{tpu_custom_call.1}
  #allocation0 [shape = 'u32[]', space=smem, size = 0x4, offset = 0x4, fixed_abs, tag = 'smem constant byte address 0x4 - core index']
  #allocation1 [shape = 'u32[144,128]{1,0:T(1,128)}', space=vmem, size = 0x12000, scoped, tag = 'internal scratch']
  %s0 = inlined_call_operand.vmem [shape: f32[2,14,4], index: 0, kind: input, shape index: {}]
  %s1 = inlined_call_operand.vmem [shape: f32[2,14,4], index: 1, kind: input, shape index: {}]
  %s2 = inlined_call_operand.vmem [shape: f32[2,14,4], index: 2, kind: input, shape index: {}]
  %s3 = inlined_call_operand.vmem [shape: f32[64,14], index: 3, kind: input, shape index: {}]
  %s4 = inlined_call_operand.vmem [shape: f32[64,1], index: 4, kind: input, shape index: {}]
  %s5 = inlined_call_operand.vmem [shape: f32[2,64,4], index: 5, kind: output, shape index: {}]
  %s6 = sld [smem:[#allocation0]]
  $region53: #{tpu_custom_call.1} parent=0
    _
  %s8 = ssub.s32 1, %s6
  %s9 = scalar_select 0, %s8, %s6
  loop: start=0, step=1, limit=4
  $region2: #{tpu_custom_call.1} parent=0 // loop_pre_header
    _
  $region3: #{tpu_custom_call.1} parent=0 // loop_header
    %s11 = sphi 0, %s15
    %p12 = scmp.ge.s32.totalorder %s11, 4
    %s18 = sphi 0, %s30
    %s19 = sphi 0, %s26
    %s20 = sphi 0, %s18
    %s21 = sphi 0, %s19
    %s22 = sphi 0, %s20
    %s23 = sphi 0, %s21
    %s35 = sphi 0, %s37
    %s38 = sphi 0, %s35
    %s39 = sphi 0, %s38
    %s55 = sphi 0, %s39
    %s63 = sphi 0, %s65
    %s66 = sphi 0, %s63
    %s67 = sphi 0, %s66
    %s83 = sphi 0, %s67
    %s91 = sphi 0, %s93
    %s94 = sphi 0, %s91
    %s95 = sphi 0, %s94
    %s111 = sphi 0, %s95
    %s115 = sphi 0, %s115
    %s117 = sphi 0, %s115
    %s118 = sphi 0, %s117
    %s132 = sphi 0, %s118
    %s136 = sphi 0, %s136
    %s138 = sphi 0, %s136
    %s139 = sphi 0, %s138
    %s153 = sphi 0, %s139
    %s161 = sphi 0, %s163
    %s164 = sphi 0, %s161
    %s165 = sphi 0, %s164
    %s181 = sphi 0, %s165
  $region4: #{tpu_custom_call.1} parent=0 // loop_header_branch
    %14 = sbr.rel (%p12) target = $region8
  $region5: #{tpu_custom_call.1} parent=0 // loop_body
    %s16 = ssub.s32 %s11, 1
    %s17 = ssub.s32 %s11, 2
    %s24 = sadd.s32 1, %s19
    %p25 = scmp.ge.s32.totalorder %s24, 1
    %s26 = scalar_select %p25, 0, %s24
    %s27 = sadd.s32 1, %s18
    %s28 = scalar_select %p25, %s27, %s18
    %p29 = scmp.ge.s32.totalorder %s28, 2
    %s30 = scalar_select %p29, 0, %s28
    %s31 = ssub.s32 %s18, %s30
    %s32 = ssub.s32 %s19, %s26
    %s33 = sor.u32 %s31, %s32
    %p34 = scmp.eq.s32.totalorder %s33, 0
    %s36 = sadd.s32 %s35, 1
    %s37 = scalar_select %p34, %s35, %s36
    %p40 = pneg %p34
    %p41 = scmp.eq.s32.totalorder %s11, 1
    %p42 = por %p40, %p41
    %p43 = scmp.ne.s32.totalorder %s35, %s38
    %p44 = scmp.eq.s32.totalorder %s11, 0
    %p45 = por %p43, %p44
    %p46 = scmp.ne.s32.totalorder %s35, %s38
    %p47 = scmp.eq.s32.totalorder %s16, 1
    %p48 = por %p46, %p47
    %p49 = scmp.ne.s32.totalorder %s38, %s39
    %p50 = scmp.eq.s32.totalorder %s16, 0
    %p51 = por %p49, %p50
    %p52 = scmp.ne.s32.totalorder %s38, %s39
    %p53 = scmp.eq.s32.totalorder %s17, 1
    %p54 = por %p52, %p53
    %p56 = scmp.ne.s32.totalorder %s39, %s55
    %p57 = scmp.eq.s32.totalorder %s17, 0
    %p58 = por %p56, %p57
    %s59 = ssub.s32 %s18, %s30
    %s60 = ssub.s32 %s19, %s26
    %s61 = sor.u32 %s59, %s60
    %p62 = scmp.eq.s32.totalorder %s61, 0
    %s64 = sadd.s32 %s63, 1
    %s65 = scalar_select %p62, %s63, %s64
    %p68 = pneg %p62
    %p69 = scmp.eq.s32.totalorder %s11, 1
    %p70 = por %p68, %p69
    %p71 = scmp.ne.s32.totalorder %s63, %s66
    %p72 = scmp.eq.s32.totalorder %s11, 0
    %p73 = por %p71, %p72
    %p74 = scmp.ne.s32.totalorder %s63, %s66
    %p75 = scmp.eq.s32.totalorder %s16, 1
    %p76 = por %p74, %p75
    %p77 = scmp.ne.s32.totalorder %s66, %s67
    %p78 = scmp.eq.s32.totalorder %s16, 0
    %p79 = por %p77, %p78
    %p80 = scmp.ne.s32.totalorder %s66, %s67
    %p81 = scmp.eq.s32.totalorder %s17, 1
    %p82 = por %p80, %p81
    %p84 = scmp.ne.s32.totalorder %s67, %s83
    %p85 = scmp.eq.s32.totalorder %s17, 0
    %p86 = por %p84, %p85
    %s87 = ssub.s32 %s18, %s30
    %s88 = ssub.s32 %s19, %s26
    %s89 = sor.u32 %s87, %s88
    %p90 = scmp.eq.s32.totalorder %s89, 0
    %s92 = sadd.s32 %s91, 1
    %s93 = scalar_select %p90, %s91, %s92
    %p96 = pneg %p90
    %p97 = scmp.eq.s32.totalorder %s11, 1
    %p98 = por %p96, %p97
    %p99 = scmp.ne.s32.totalorder %s91, %s94
    %p100 = scmp.eq.s32.totalorder %s11, 0
    %p101 = por %p99, %p100
    %p102 = scmp.ne.s32.totalorder %s91, %s94
    %p103 = scmp.eq.s32.totalorder %s16, 1
    %p104 = por %p102, %p103
    %p105 = scmp.ne.s32.totalorder %s94, %s95
    %p106 = scmp.eq.s32.totalorder %s16, 0
    %p107 = por %p105, %p106
    %p108 = scmp.ne.s32.totalorder %s94, %s95
    %p109 = scmp.eq.s32.totalorder %s17, 1
    %p110 = por %p108, %p109
    %p112 = scmp.ne.s32.totalorder %s95, %s111
    %p113 = scmp.eq.s32.totalorder %s17, 0
    %p114 = por %p112, %p113
    %s116 = sadd.s32 %s115, 1
    %p119 = scmp.eq.s32.totalorder %s11, 1
    %p120 = scmp.ne.s32.totalorder %s115, %s117
    %p121 = scmp.eq.s32.totalorder %s11, 0
    %p122 = por %p120, %p121
    %p123 = scmp.ne.s32.totalorder %s115, %s117
    %p124 = scmp.eq.s32.totalorder %s16, 1
    %p125 = por %p123, %p124
    %p126 = scmp.ne.s32.totalorder %s117, %s118
    %p127 = scmp.eq.s32.totalorder %s16, 0
    %p128 = por %p126, %p127
    %p129 = scmp.ne.s32.totalorder %s117, %s118
    %p130 = scmp.eq.s32.totalorder %s17, 1
    %p131 = por %p129, %p130
    %p133 = scmp.ne.s32.totalorder %s118, %s132
    %p134 = scmp.eq.s32.totalorder %s17, 0
    %p135 = por %p133, %p134
    %s137 = sadd.s32 %s136, 1
    %p140 = scmp.eq.s32.totalorder %s11, 1
    %p141 = scmp.ne.s32.totalorder %s136, %s138
    %p142 = scmp.eq.s32.totalorder %s11, 0
    %p143 = por %p141, %p142
    %p144 = scmp.ne.s32.totalorder %s136, %s138
    %p145 = scmp.eq.s32.totalorder %s16, 1
    %p146 = por %p144, %p145
    %p147 = scmp.ne.s32.totalorder %s138, %s139
    %p148 = scmp.eq.s32.totalorder %s16, 0
    %p149 = por %p147, %p148
    %p150 = scmp.ne.s32.totalorder %s138, %s139
    %p151 = scmp.eq.s32.totalorder %s17, 1
    %p152 = por %p150, %p151
    %p154 = scmp.ne.s32.totalorder %s139, %s153
    %p155 = scmp.eq.s32.totalorder %s17, 0
    %p156 = por %p154, %p155
    %s157 = ssub.s32 %s18, %s30
    %s158 = ssub.s32 %s19, %s26
    %s159 = sor.u32 %s157, %s158
    %p160 = scmp.eq.s32.totalorder %s159, 0
    %s162 = sadd.s32 %s161, 1
    %s163 = scalar_select %p160, %s161, %s162
    %p166 = pneg %p160
    %p167 = scmp.eq.s32.totalorder %s11, 1
    %p168 = por %p166, %p167
    %p169 = scmp.ne.s32.totalorder %s161, %s164
    %p170 = scmp.eq.s32.totalorder %s11, 0
    %p171 = por %p169, %p170
    %p172 = scmp.ne.s32.totalorder %s161, %s164
    %p173 = scmp.eq.s32.totalorder %s16, 1
    %p174 = por %p172, %p173
    %p175 = scmp.ne.s32.totalorder %s164, %s165
    %p176 = scmp.eq.s32.totalorder %s16, 0
    %p177 = por %p175, %p176
    %p178 = scmp.ne.s32.totalorder %s164, %s165
    %p179 = scmp.eq.s32.totalorder %s17, 1
    %p180 = por %p178, %p179
    %p182 = scmp.ne.s32.totalorder %s165, %s181
    %p183 = scmp.eq.s32.totalorder %s17, 0
    %p184 = por %p182, %p183
    %p185 = scmp.le.s32.totalorder 1, %s11
    %p186 = scmp.lt.s32.totalorder %s11, 3
    %p187 = pnand %p185, %p186
    %p188 = pneg %p187
    // Predicated region
    $region9: #{tpu_custom_call.1} parent=5 // pred_check
      _
    $region10: #{tpu_custom_call.1} parent=5 // pred_check_branch
      %190 = sbr.rel (%p187) target = $region12
    $region11: #{tpu_custom_call.1} parent=5 // pred_region
      %s191 = ssub.s32 %s11, 1
      // Predicated region
      $region13: #{tpu_custom_call.1} parent=11 // pred_check
        %p192 = pneg %p128
      $region14: #{tpu_custom_call.1} parent=11 // pred_check_branch
        %194 = sbr.rel (%p192) target = $region16
      $region15: #{tpu_custom_call.1} parent=11 // pred_region
        _
      $region16: #{tpu_custom_call.1} parent=11 // pred_fallthru
        _
      // Predicated region
      $region17: #{tpu_custom_call.1} parent=11 // pred_check
        %p195 = pneg %p149
      $region18: #{tpu_custom_call.1} parent=11 // pred_check_branch
        %197 = sbr.rel (%p195) target = $region20
      $region19: #{tpu_custom_call.1} parent=11 // pred_region
        _
      $region20: #{tpu_custom_call.1} parent=11 // pred_fallthru
        _
    $region12: #{tpu_custom_call.1} parent=5 // pred_fallthru
      _
    %p198 = scmp.lt.s32.totalorder %s11, 2
    // Predicated region
    $region21: #{tpu_custom_call.1} parent=5 // pred_check
      %p199 = pneg %p198
    $region22: #{tpu_custom_call.1} parent=5 // pred_check_branch
      %201 = sbr.rel (%p199) target = $region24
    $region23: #{tpu_custom_call.1} parent=5 // pred_region
      // Predicated region
      $region25: #{tpu_custom_call.1} parent=23 // pred_check
        %p202 = pneg %p45
      $region26: #{tpu_custom_call.1} parent=23 // pred_check_branch
        %204 = sbr.rel (%p202) target = $region28
      $region27: #{tpu_custom_call.1} parent=23 // pred_region
        %p205 = scmp.lt.s32.totalorder %s18, 1
        %s206 = scalar_select %p205, %s18, 1
        %p207 = scmp.lt.s32.totalorder %s19, 0
        %s208 = scalar_select %p207, %s19, 0
        %s209 = smul.addr %s206, 2
        %s210 = sadd.s32 %s208, %s209
        %s211 = smul.addr %s210, 8
        %s212 = scalar_lea.vmem %s0, %s211
      $region28: #{tpu_custom_call.1} parent=23 // pred_fallthru
        _
      // Predicated region
      $region29: #{tpu_custom_call.1} parent=23 // pred_check
        %p213 = pneg %p73
      $region30: #{tpu_custom_call.1} parent=23 // pred_check_branch
        %215 = sbr.rel (%p213) target = $region32
      $region31: #{tpu_custom_call.1} parent=23 // pred_region
        %p216 = scmp.lt.s32.totalorder %s18, 1
        %s217 = scalar_select %p216, %s18, 1
        %p218 = scmp.lt.s32.totalorder %s19, 0
        %s219 = scalar_select %p218, %s19, 0
        %s220 = smul.addr %s217, 2
        %s221 = sadd.s32 %s219, %s220
        %s222 = smul.addr %s221, 8
        %s223 = scalar_lea.vmem %s1, %s222
      $region32: #{tpu_custom_call.1} parent=23 // pred_fallthru
        _
      // Predicated region
      $region33: #{tpu_custom_call.1} parent=23 // pred_check
        %p224 = pneg %p101
      $region34: #{tpu_custom_call.1} parent=23 // pred_check_branch
        %226 = sbr.rel (%p224) target = $region36
      $region35: #{tpu_custom_call.1} parent=23 // pred_region
        %p227 = scmp.lt.s32.totalorder %s18, 1
        %s228 = scalar_select %p227, %s18, 1
        %p229 = scmp.lt.s32.totalorder %s19, 0
        %s230 = scalar_select %p229, %s19, 0
        %s231 = smul.addr %s228, 2
        %s232 = sadd.s32 %s230, %s231
        %s233 = smul.addr %s232, 8
        %s234 = scalar_lea.vmem %s2, %s233
      $region36: #{tpu_custom_call.1} parent=23 // pred_fallthru
        _
    $region24: #{tpu_custom_call.1} parent=5 // pred_fallthru
      _
    %p235 = scmp.le.s32.totalorder 1, %s11
    %p236 = scmp.lt.s32.totalorder %s11, 3
    %p237 = pnand %p235, %p236
    %p238 = pneg %p237
    // Predicated region
    $region37: #{tpu_custom_call.1} parent=5 // pred_check
      _
    $region38: #{tpu_custom_call.1} parent=5 // pred_check_branch
      %240 = sbr.rel (%p237) target = $region40
    $region39: #{tpu_custom_call.1} parent=5 // pred_region
      %s241 = ssub.s32 %s11, 1
      %p242 = scmp.lt.s32.totalorder %s20, 1
      %s243 = scalar_select %p242, %s20, 1
      %p244 = scmp.lt.s32.totalorder %s21, 0
      %s245 = scalar_select %p244, %s21, 0
      %s246 = smul.addr %s243, 2
      %s247 = sadd.s32 %s245, %s246
      %s248 = smul.addr %s247, 8
      %s249 = scalar_lea.vmem %s0, %s248
      %p250 = pneg %p51
      %p251 = pneg %p48
      %p252 = scmp.lt.s32.totalorder %s20, 1
      %s253 = scalar_select %p252, %s20, 1
      %p254 = scmp.lt.s32.totalorder %s21, 0
      %s255 = scalar_select %p254, %s21, 0
      %s256 = smul.addr %s253, 2
      %s257 = sadd.s32 %s255, %s256
      %s258 = smul.addr %s257, 8
      %s259 = scalar_lea.vmem %s1, %s258
      %p260 = pneg %p79
      %p261 = pneg %p76
      %p262 = scmp.lt.s32.totalorder %s20, 1
      %s263 = scalar_select %p262, %s20, 1
      %p264 = scmp.lt.s32.totalorder %s21, 0
      %s265 = scalar_select %p264, %s21, 0
      %s266 = smul.addr %s263, 2
      %s267 = sadd.s32 %s265, %s266
      %s268 = smul.addr %s267, 8
      %s269 = scalar_lea.vmem %s2, %s268
      %p270 = pneg %p107
      %p271 = pneg %p104
      %p272 = pneg %p128
      %p273 = pneg %p125
      %p274 = pneg %p149
      %p275 = pneg %p146
      %p276 = pneg %p177
      %p277 = pneg %p174
      %p278 = scmp.lt.s32.totalorder %s20, 1
      %s279 = scalar_select %p278, %s20, 1
      %p280 = scmp.lt.s32.totalorder %s21, 0
      %s281 = scalar_select %p280, %s21, 0
      %s282 = smul.addr %s279, 8
      %s283 = sadd.s32 %s281, %s282
      %s284 = smul.addr %s283, 8
      %s285 = scalar_lea.vmem %s5, %s284
      %p286 = scmp.lt.s32.totalorder %s20, 1
      %s287 = scalar_select %p286, %s20, 1
      %p288 = scmp.lt.s32.totalorder %s21, 0
      %s289 = scalar_select %p288, %s21, 0
      %s290 = smul.addr %s287, 2
      %s291 = sadd.s32 %s289, %s290
      %s292 = smul.addr %s291, 8
      %s293 = scalar_lea.vmem %s0, %s292
      %p294 = scmp.lt.s32.totalorder %s20, 1
      %s295 = scalar_select %p294, %s20, 1
      %p296 = scmp.lt.s32.totalorder %s21, 0
      %s297 = scalar_select %p296, %s21, 0
      %s298 = smul.addr %s295, 2
      %s299 = sadd.s32 %s297, %s298
      %s300 = smul.addr %s299, 8
      %s301 = scalar_lea.vmem %s1, %s300
      %p302 = scmp.lt.s32.totalorder %s20, 1
      %s303 = scalar_select %p302, %s20, 1
      %p304 = scmp.lt.s32.totalorder %s21, 0
      %s305 = scalar_select %p304, %s21, 0
      %s306 = smul.addr %s303, 2
      %s307 = sadd.s32 %s305, %s306
      %s308 = smul.addr %s307, 8
      %s309 = scalar_lea.vmem %s2, %s308
      %p310 = scmp.lt.s32.totalorder %s20, 1
      %s311 = scalar_select %p310, %s20, 1
      %p312 = scmp.lt.s32.totalorder %s21, 0
      %s313 = scalar_select %p312, %s21, 0
      %s314 = smul.addr %s311, 8
      %s315 = sadd.s32 %s313, %s314
      %s316 = smul.addr %s315, 8
      %s317 = scalar_lea.vmem %s5, %s316
      %v318 = vld [vmem:[%s3] sm:$0xff]
      %v319 = vld [vmem:[%s3 + $0x8] sm:$0xff]
      %v320 = vld [vmem:[%s3 + $0x10] sm:$0xff]
      %v321 = vld [vmem:[%s3 + $0x18] sm:$0xff]
      %v322 = vld [vmem:[%s3 + $0x20] sm:$0xff]
      %v323 = vld [vmem:[%s3 + $0x28] sm:$0xff]
      %v324 = vld [vmem:[%s3 + $0x30] sm:$0xff]
      %v325 = vld [vmem:[%s3 + $0x38] sm:$0xff]
      %v326 = vld [vmem:[%s293] sm:$0xff]
      %v327 = vld [vmem:[%s293 + $0x8] sm:$0x3f]
      %vm328 = vcmask 113664
      %v330 = vsel %vm328, %v318, 0
      %v333 = vsel %vm328, %v319, 0
      %v336 = vsel %vm328, %v320, 0
      %v339 = vsel %vm328, %v321, 0
      %v342 = vsel %vm328, %v322, 0
      %v345 = vsel %vm328, %v323, 0
      %v348 = vsel %vm328, %v324, 0
      %v351 = vsel %vm328, %v325, 0
      %vm353 = vcmask 1045504
      %v355 = vsel %vm353, %v327, 0
      %357 = vmatprep.subr.mxu0 0.0
      %358 = vmatpush1.msra.mxu0 0.0
      %359 = vmatprep.subr.mxu0 0.0
      %360 = vmatpush1.msra.mxu0 0.0
      %361 = vmatprep.subr.mxu0 0.0
      %362 = vmatpush1.msra.mxu0 0.0
      %363 = vmatprep.subr.mxu0 0.0
      %364 = vmatpush1.msra.mxu0 0.0
      %365 = vmatprep.subr.mxu0 0.0
      %366 = vmatpush1.msra.mxu0 0.0
      %367 = vmatprep.subr.mxu0 0.0
      %368 = vmatpush1.msra.mxu0 0.0
      %369 = vmatprep.subr.mxu0 0.0
      %370 = vmatpush1.msra.mxu0 0.0
      %371 = vmatprep.subr.mxu0 0.0
      %372 = vmatpush1.msra.mxu0 0.0
      %373 = vmatprep.subr.mxu0 0.0
      %374 = vmatpush1.msra.mxu0 0.0
      %375 = vmatprep.subr.mxu0 0.0
      %376 = vmatpush1.msra.mxu0 0.0
      %377 = vmatprep.subr.mxu0 0.0
      %378 = vmatpush1.msra.mxu0 0.0
      %379 = vmatprep.subr.mxu0 0.0
      %380 = vmatpush1.msra.mxu0 0.0
      %381 = vmatprep.subr.mxu0 0.0
      %382 = vmatpush1.msra.mxu0 0.0
      %383 = vmatprep.subr.mxu0 0.0
      %384 = vmatpush1.msra.mxu0 0.0
      %385 = vmatprep.subr.mxu0 0.0
      %386 = vmatpush1.msra.mxu0 %v355
      %387 = vmatprep.subr.mxu0 0.0
      %388 = vmatpush1.msra.mxu0 %v326
      %389 = vmatprep.subr.mxu0 0.0
      %390 = vmatpush2.msra.mxu0 0.0
      %391 = vmatprep.subr.mxu0 0.0
      %392 = vmatpush2.msra.mxu0 0.0
      %393 = vmatprep.subr.mxu0 0.0
      %394 = vmatpush2.msra.mxu0 0.0
      %395 = vmatprep.subr.mxu0 0.0
      %396 = vmatpush2.msra.mxu0 0.0
      %397 = vmatprep.subr.mxu0 0.0
      %398 = vmatpush2.msra.mxu0 0.0
      %399 = vmatprep.subr.mxu0 0.0
      %400 = vmatpush2.msra.mxu0 0.0
      %401 = vmatprep.subr.mxu0 0.0
      %402 = vmatpush2.msra.mxu0 0.0
      %403 = vmatprep.subr.mxu0 0.0
      %404 = vmatpush2.msra.mxu0 0.0
      %405 = vmatprep.subr.mxu0 0.0
      %406 = vmatpush2.msra.mxu0 0.0
      %407 = vmatprep.subr.mxu0 0.0
      %408 = vmatpush2.msra.mxu0 0.0
      %409 = vmatprep.subr.mxu0 0.0
      %410 = vmatpush2.msra.mxu0 0.0
      %411 = vmatprep.subr.mxu0 0.0
      %412 = vmatpush2.msra.mxu0 0.0
      %413 = vmatprep.subr.mxu0 0.0
      %414 = vmatpush2.msra.mxu0 0.0
      %415 = vmatprep.subr.mxu0 0.0
      %416 = vmatpush2.msra.mxu0 0.0
      %417 = vmatprep.subr.mxu0 0.0
      %418 = vmatpush2.msra.mxu0 0.0
      %419 = vmatprep.subr.mxu0 0.0
      %420 = vmatpush2.msra.mxu0 0.0
      %421 = vmatprep.mubr.f32.mxu0 0.0
      %422 = vmatmul.mubr.f32.gmra.mxu0 %v330
      %v423 = vpop.f32.mrf.mxu0
      %v424 = vadd.f32 0.0, %v423
      %v425 = vpop.f32.mrf.mxu0
      %426 = vmatprep.mubr.f32.mxu0 0.0
      %427 = vmatmul.mubr.f32.gmra.mxu0 %v333
      %v428 = vpop.f32.mrf.mxu0
      %v429 = vadd.f32 0.0, %v428
      %v430 = vpop.f32.mrf.mxu0
      %431 = vmatprep.mubr.f32.mxu0 0.0
      %432 = vmatmul.mubr.f32.gmra.mxu0 %v336
      %v433 = vpop.f32.mrf.mxu0
      %v434 = vadd.f32 0.0, %v433
      %v435 = vpop.f32.mrf.mxu0
      %436 = vmatprep.mubr.f32.mxu0 0.0
      %437 = vmatmul.mubr.f32.gmra.mxu0 %v339
      %v438 = vpop.f32.mrf.mxu0
      %v439 = vadd.f32 0.0, %v438
      %v440 = vpop.f32.mrf.mxu0
      %441 = vmatprep.mubr.f32.mxu0 0.0
      %442 = vmatmul.mubr.f32.gmra.mxu0 %v342
      %v443 = vpop.f32.mrf.mxu0
      %v444 = vadd.f32 0.0, %v443
      %v445 = vpop.f32.mrf.mxu0
      %446 = vmatprep.mubr.f32.mxu0 0.0
      %447 = vmatmul.mubr.f32.gmra.mxu0 %v345
      %v448 = vpop.f32.mrf.mxu0
      %v449 = vadd.f32 0.0, %v448
      %v450 = vpop.f32.mrf.mxu0
      %451 = vmatprep.mubr.f32.mxu0 0.0
      %452 = vmatmul.mubr.f32.gmra.mxu0 %v348
      %v453 = vpop.f32.mrf.mxu0
      %v454 = vadd.f32 0.0, %v453
      %v455 = vpop.f32.mrf.mxu0
      %456 = vmatprep.mubr.f32.mxu0 0.0
      %457 = vmatmul.mubr.f32.gmra.mxu0 %v351
      %v458 = vpop.f32.mrf.mxu0
      %v459 = vadd.f32 0.0, %v458
      %v460 = vpop.f32.mrf.mxu0
      %461 = vdwg.mxu0
      %v462 = vld [vmem:[%s301] sm:$0xff]
      %v463 = vld [vmem:[%s301 + $0x8] sm:$0x3f]
      %v465 = vsel %vm353, %v463, 0
      %467 = vmatprep.subr.mxu0 0.0
      %468 = vmatpush1.msra.mxu0 0.0
      %469 = vmatprep.subr.mxu0 0.0
      %470 = vmatpush1.msra.mxu0 0.0
      %471 = vmatprep.subr.mxu0 0.0
      %472 = vmatpush1.msra.mxu0 0.0
      %473 = vmatprep.subr.mxu0 0.0
      %474 = vmatpush1.msra.mxu0 0.0
      %475 = vmatprep.subr.mxu0 0.0
      %476 = vmatpush1.msra.mxu0 0.0
      %477 = vmatprep.subr.mxu0 0.0
      %478 = vmatpush1.msra.mxu0 0.0
      %479 = vmatprep.subr.mxu0 0.0
      %480 = vmatpush1.msra.mxu0 0.0
      %481 = vmatprep.subr.mxu0 0.0
      %482 = vmatpush1.msra.mxu0 0.0
      %483 = vmatprep.subr.mxu0 0.0
      %484 = vmatpush1.msra.mxu0 0.0
      %485 = vmatprep.subr.mxu0 0.0
      %486 = vmatpush1.msra.mxu0 0.0
      %487 = vmatprep.subr.mxu0 0.0
      %488 = vmatpush1.msra.mxu0 0.0
      %489 = vmatprep.subr.mxu0 0.0
      %490 = vmatpush1.msra.mxu0 0.0
      %491 = vmatprep.subr.mxu0 0.0
      %492 = vmatpush1.msra.mxu0 0.0
      %493 = vmatprep.subr.mxu0 0.0
      %494 = vmatpush1.msra.mxu0 0.0
      %495 = vmatprep.subr.mxu0 0.0
      %496 = vmatpush1.msra.mxu0 %v465
      %497 = vmatprep.subr.mxu0 0.0
      %498 = vmatpush1.msra.mxu0 %v462
      %499 = vmatprep.subr.mxu0 0.0
      %500 = vmatpush2.msra.mxu0 0.0
      %501 = vmatprep.subr.mxu0 0.0
      %502 = vmatpush2.msra.mxu0 0.0
      %503 = vmatprep.subr.mxu0 0.0
      %504 = vmatpush2.msra.mxu0 0.0
      %505 = vmatprep.subr.mxu0 0.0
      %506 = vmatpush2.msra.mxu0 0.0
      %507 = vmatprep.subr.mxu0 0.0
      %508 = vmatpush2.msra.mxu0 0.0
      %509 = vmatprep.subr.mxu0 0.0
      %510 = vmatpush2.msra.mxu0 0.0
      %511 = vmatprep.subr.mxu0 0.0
      %512 = vmatpush2.msra.mxu0 0.0
      %513 = vmatprep.subr.mxu0 0.0
      %514 = vmatpush2.msra.mxu0 0.0
      %515 = vmatprep.subr.mxu0 0.0
      %516 = vmatpush2.msra.mxu0 0.0
      %517 = vmatprep.subr.mxu0 0.0
      %518 = vmatpush2.msra.mxu0 0.0
      %519 = vmatprep.subr.mxu0 0.0
      %520 = vmatpush2.msra.mxu0 0.0
      %521 = vmatprep.subr.mxu0 0.0
      %522 = vmatpush2.msra.mxu0 0.0
      %523 = vmatprep.subr.mxu0 0.0
      %524 = vmatpush2.msra.mxu0 0.0
      %525 = vmatprep.subr.mxu0 0.0
      %526 = vmatpush2.msra.mxu0 0.0
      %527 = vmatprep.subr.mxu0 0.0
      %528 = vmatpush2.msra.mxu0 0.0
      %529 = vmatprep.subr.mxu0 0.0
      %530 = vmatpush2.msra.mxu0 0.0
      %531 = vmatprep.mubr.f32.mxu0 0.0
      %532 = vmatmul.mubr.f32.gmra.mxu0 %v330
      %v533 = vpop.f32.mrf.mxu0
      %v534 = vadd.f32 0.0, %v533
      %v535 = vpop.f32.mrf.mxu0
      %536 = vmatprep.mubr.f32.mxu0 0.0
      %537 = vmatmul.mubr.f32.gmra.mxu0 %v333
      %v538 = vpop.f32.mrf.mxu0
      %v539 = vadd.f32 0.0, %v538
      %v540 = vpop.f32.mrf.mxu0
      %541 = vmatprep.mubr.f32.mxu0 0.0
      %542 = vmatmul.mubr.f32.gmra.mxu0 %v336
      %v543 = vpop.f32.mrf.mxu0
      %v544 = vadd.f32 0.0, %v543
      %v545 = vpop.f32.mrf.mxu0
      %546 = vmatprep.mubr.f32.mxu0 0.0
      %547 = vmatmul.mubr.f32.gmra.mxu0 %v339
      %v548 = vpop.f32.mrf.mxu0
      %v549 = vadd.f32 0.0, %v548
      %v550 = vpop.f32.mrf.mxu0
      %551 = vmatprep.mubr.f32.mxu0 0.0
      %552 = vmatmul.mubr.f32.gmra.mxu0 %v342
      %v553 = vpop.f32.mrf.mxu0
      %v554 = vadd.f32 0.0, %v553
      %v555 = vpop.f32.mrf.mxu0
      %556 = vmatprep.mubr.f32.mxu0 0.0
      %557 = vmatmul.mubr.f32.gmra.mxu0 %v345
      %v558 = vpop.f32.mrf.mxu0
      %v559 = vadd.f32 0.0, %v558
      %v560 = vpop.f32.mrf.mxu0
      %561 = vmatprep.mubr.f32.mxu0 0.0
      %562 = vmatmul.mubr.f32.gmra.mxu0 %v348
      %v563 = vpop.f32.mrf.mxu0
      %v564 = vadd.f32 0.0, %v563
      %v565 = vpop.f32.mrf.mxu0
      %566 = vmatprep.mubr.f32.mxu0 0.0
      %567 = vmatmul.mubr.f32.gmra.mxu0 %v351
      %v568 = vpop.f32.mrf.mxu0
      %v569 = vadd.f32 0.0, %v568
      %v570 = vpop.f32.mrf.mxu0
      %571 = vdwg.mxu0
      %v572 = vld [vmem:[%s309] sm:$0xff]
      %v573 = vld [vmem:[%s309 + $0x8] sm:$0x3f]
      %v575 = vsel %vm353, %v573, 0
      %577 = vmatprep.subr.mxu0 0.0
      %578 = vmatpush1.msra.mxu0 0.0
      %579 = vmatprep.subr.mxu0 0.0
      %580 = vmatpush1.msra.mxu0 0.0
      %581 = vmatprep.subr.mxu0 0.0
      %582 = vmatpush1.msra.mxu0 0.0
      %583 = vmatprep.subr.mxu0 0.0
      %584 = vmatpush1.msra.mxu0 0.0
      %585 = vmatprep.subr.mxu0 0.0
      %586 = vmatpush1.msra.mxu0 0.0
      %587 = vmatprep.subr.mxu0 0.0
      %588 = vmatpush1.msra.mxu0 0.0
      %589 = vmatprep.subr.mxu0 0.0
      %590 = vmatpush1.msra.mxu0 0.0
      %591 = vmatprep.subr.mxu0 0.0
      %592 = vmatpush1.msra.mxu0 0.0
      %593 = vmatprep.subr.mxu0 0.0
      %594 = vmatpush1.msra.mxu0 0.0
      %595 = vmatprep.subr.mxu0 0.0
      %596 = vmatpush1.msra.mxu0 0.0
      %597 = vmatprep.subr.mxu0 0.0
      %598 = vmatpush1.msra.mxu0 0.0
      %599 = vmatprep.subr.mxu0 0.0
      %600 = vmatpush1.msra.mxu0 0.0
      %601 = vmatprep.subr.mxu0 0.0
      %602 = vmatpush1.msra.mxu0 0.0
      %603 = vmatprep.subr.mxu0 0.0
      %604 = vmatpush1.msra.mxu0 0.0
      %605 = vmatprep.subr.mxu0 0.0
      %606 = vmatpush1.msra.mxu0 %v575
      %607 = vmatprep.subr.mxu0 0.0
      %608 = vmatpush1.msra.mxu0 %v572
      %609 = vmatprep.subr.mxu0 0.0
      %610 = vmatpush2.msra.mxu0 0.0
      %611 = vmatprep.subr.mxu0 0.0
      %612 = vmatpush2.msra.mxu0 0.0
      %613 = vmatprep.subr.mxu0 0.0
      %614 = vmatpush2.msra.mxu0 0.0
      %615 = vmatprep.subr.mxu0 0.0
      %616 = vmatpush2.msra.mxu0 0.0
      %617 = vmatprep.subr.mxu0 0.0
      %618 = vmatpush2.msra.mxu0 0.0
      %619 = vmatprep.subr.mxu0 0.0
      %620 = vmatpush2.msra.mxu0 0.0
      %621 = vmatprep.subr.mxu0 0.0
      %622 = vmatpush2.msra.mxu0 0.0
      %623 = vmatprep.subr.mxu0 0.0
      %624 = vmatpush2.msra.mxu0 0.0
      %625 = vmatprep.subr.mxu0 0.0
      %626 = vmatpush2.msra.mxu0 0.0
      %627 = vmatprep.subr.mxu0 0.0
      %628 = vmatpush2.msra.mxu0 0.0
      %629 = vmatprep.subr.mxu0 0.0
      %630 = vmatpush2.msra.mxu0 0.0
      %631 = vmatprep.subr.mxu0 0.0
      %632 = vmatpush2.msra.mxu0 0.0
      %633 = vmatprep.subr.mxu0 0.0
      %634 = vmatpush2.msra.mxu0 0.0
      %635 = vmatprep.subr.mxu0 0.0
      %636 = vmatpush2.msra.mxu0 0.0
      %637 = vmatprep.subr.mxu0 0.0
      %638 = vmatpush2.msra.mxu0 0.0
      %639 = vmatprep.subr.mxu0 0.0
      %640 = vmatpush2.msra.mxu0 0.0
      %641 = vmatprep.mubr.f32.mxu0 0.0
      %642 = vmatmul.mubr.f32.gmra.mxu0 %v330
      %v643 = vpop.f32.mrf.mxu0
      %v644 = vadd.f32 0.0, %v643
      %v645 = vpop.f32.mrf.mxu0
      %646 = vmatprep.mubr.f32.mxu0 0.0
      %647 = vmatmul.mubr.f32.gmra.mxu0 %v333
      %v648 = vpop.f32.mrf.mxu0
      %v649 = vadd.f32 0.0, %v648
      %v650 = vpop.f32.mrf.mxu0
      %651 = vmatprep.mubr.f32.mxu0 0.0
      %652 = vmatmul.mubr.f32.gmra.mxu0 %v336
      %v653 = vpop.f32.mrf.mxu0
      %v654 = vadd.f32 0.0, %v653
      %v655 = vpop.f32.mrf.mxu0
      %656 = vmatprep.mubr.f32.mxu0 0.0
      %657 = vmatmul.mubr.f32.gmra.mxu0 %v339
      %v658 = vpop.f32.mrf.mxu0
      %v659 = vadd.f32 0.0, %v658
      %v660 = vpop.f32.mrf.mxu0
      %661 = vmatprep.mubr.f32.mxu0 0.0
      %662 = vmatmul.mubr.f32.gmra.mxu0 %v342
      %v663 = vpop.f32.mrf.mxu0
      %v664 = vadd.f32 0.0, %v663
      %v665 = vpop.f32.mrf.mxu0
      %666 = vmatprep.mubr.f32.mxu0 0.0
      %667 = vmatmul.mubr.f32.gmra.mxu0 %v345
      %v668 = vpop.f32.mrf.mxu0
      %v669 = vadd.f32 0.0, %v668
      %v670 = vpop.f32.mrf.mxu0
      %671 = vmatprep.mubr.f32.mxu0 0.0
      %672 = vmatmul.mubr.f32.gmra.mxu0 %v348
      %v673 = vpop.f32.mrf.mxu0
      %v674 = vadd.f32 0.0, %v673
      %v675 = vpop.f32.mrf.mxu0
      %676 = vmatprep.mubr.f32.mxu0 0.0
      %677 = vmatmul.mubr.f32.gmra.mxu0 %v351
      %v678 = vpop.f32.mrf.mxu0
      %v679 = vadd.f32 0.0, %v678
      %v680 = vpop.f32.mrf.mxu0
      %681 = vdwg.mxu0
      %s682 = smul.u32 %s21, 4
      %v683 = vlaneseq
      %v684 = vand.u32 %v683, 127
      %v685 = vstv %s682
      %v686 = vadd.s32 %v685, %v684
      %vm687 = vcmp.ge.s32.totalorder %v686, 1
      %v688 = vsel %vm687, %v424, -inf
      %v689 = vsel %vm687, %v429, -inf
      %v690 = vsel %vm687, %v434, -inf
      %v691 = vsel %vm687, %v439, -inf
      %v692 = vsel %vm687, %v444, -inf
      %v693 = vsel %vm687, %v449, -inf
      %v694 = vsel %vm687, %v454, -inf
      %v695 = vsel %vm687, %v459, -inf
      %v696 = vmul.u32 %v686, 2
      %v697 = vadd.s32 %v696, 1
      %vm698 = vcmp.lt.s32.totalorder %v697, 8
      %v699 = vsel %vm698, %v644, -inf
      %v700 = vsel %vm698, %v649, -inf
      %v701 = vsel %vm698, %v654, -inf
      %v702 = vsel %vm698, %v659, -inf
      %v703 = vsel %vm698, %v664, -inf
      %v704 = vsel %vm698, %v669, -inf
      %v705 = vsel %vm698, %v674, -inf
      %v706 = vsel %vm698, %v679, -inf
      %v707 = vmax.f32 %v688, %v534
      %v708 = vmax.f32 %v689, %v539
      %v709 = vmax.f32 %v690, %v544
      %v710 = vmax.f32 %v691, %v549
      %v711 = vmax.f32 %v692, %v554
      %v712 = vmax.f32 %v693, %v559
      %v713 = vmax.f32 %v694, %v564
      %v714 = vmax.f32 %v695, %v569
      %v715 = vmax.f32 %v707, %v699
      %v716 = vmax.f32 %v708, %v700
      %v717 = vmax.f32 %v709, %v701
      %v718 = vmax.f32 %v710, %v702
      %v719 = vmax.f32 %v711, %v703
      %v720 = vmax.f32 %v712, %v704
      %v721 = vmax.f32 %v713, %v705
      %v722 = vmax.f32 %v714, %v706
      %v723 = vld [vmem:[%s4] sm:$0xff]
      %v724 = vld [vmem:[%s4 + $0x8] sm:$0xff]
      %v725 = vld [vmem:[%s4 + $0x10] sm:$0xff]
      %v726 = vld [vmem:[%s4 + $0x18] sm:$0xff]
      %v727 = vld [vmem:[%s4 + $0x20] sm:$0xff]
      %v728 = vld [vmem:[%s4 + $0x28] sm:$0xff]
      %v729 = vld [vmem:[%s4 + $0x30] sm:$0xff]
      %v730 = vld [vmem:[%s4 + $0x38] sm:$0xff]
      %732 = vset.pattern.permute.xlu0 0
      %733 = vperm.xlu0 %732, %v723
      %v734 = vpop.permute.xlu0 %733
      %737 = vset.pattern.permute.xlu0 0
      %738 = vperm.xlu0 %737, %v724
      %v739 = vpop.permute.xlu0 %738
      %742 = vset.pattern.permute.xlu0 0
      %743 = vperm.xlu0 %742, %v725
      %v744 = vpop.permute.xlu0 %743
      %747 = vset.pattern.permute.xlu0 0
      %748 = vperm.xlu0 %747, %v726
      %v749 = vpop.permute.xlu0 %748
      %752 = vset.pattern.permute.xlu0 0
      %753 = vperm.xlu0 %752, %v727
      %v754 = vpop.permute.xlu0 %753
      %757 = vset.pattern.permute.xlu0 0
      %758 = vperm.xlu0 %757, %v728
      %v759 = vpop.permute.xlu0 %758
      %762 = vset.pattern.permute.xlu0 0
      %763 = vperm.xlu0 %762, %v729
      %v764 = vpop.permute.xlu0 %763
      %767 = vset.pattern.permute.xlu0 0
      %768 = vperm.xlu0 %767, %v730
      %v769 = vpop.permute.xlu0 %768
      %v771 = vadd.f32 %v715, %v734
      %v772 = vadd.f32 %v716, %v739
      %v773 = vadd.f32 %v717, %v744
      %v774 = vadd.f32 %v718, %v749
      %v775 = vadd.f32 %v719, %v754
      %v776 = vadd.f32 %v720, %v759
      %v777 = vadd.f32 %v721, %v764
      %v778 = vadd.f32 %v722, %v769
      %vm779 = vcmask 31744
      %780 = vst.msk [vmem:[%s317] sm:$0xff] %vm779, %v771
      %781 = vst.msk [vmem:[%s317 + $0x8] sm:$0xff] %vm779, %v772
      %782 = vst.msk [vmem:[%s317 + $0x10] sm:$0xff] %vm779, %v773
      %783 = vst.msk [vmem:[%s317 + $0x18] sm:$0xff] %vm779, %v774
      %784 = vst.msk [vmem:[%s317 + $0x20] sm:$0xff] %vm779, %v775
      %785 = vst.msk [vmem:[%s317 + $0x28] sm:$0xff] %vm779, %v776
      %786 = vst.msk [vmem:[%s317 + $0x30] sm:$0xff] %vm779, %v777
      %787 = vst.msk [vmem:[%s317 + $0x38] sm:$0xff] %vm779, %v778
      %p788 = scmp.lt.s32.totalorder %s20, 1
      %s789 = scalar_select %p788, %s20, 1
      %p790 = scmp.lt.s32.totalorder %s21, 0
      %s791 = scalar_select %p790, %s21, 0
      %s792 = smul.addr %s789, 8
      %s793 = sadd.s32 %s791, %s792
      %s794 = smul.addr %s793, 8
      %s795 = scalar_lea.vmem %s5, %s794
      // Predicated region
      $region41: #{tpu_custom_call.1} parent=39 // pred_check
        %p796 = pneg %p174
      $region42: #{tpu_custom_call.1} parent=39 // pred_check_branch
        %798 = sbr.rel (%p796) target = $region44
      $region43: #{tpu_custom_call.1} parent=39 // pred_region
        _
      $region44: #{tpu_custom_call.1} parent=39 // pred_fallthru
        _
    $region40: #{tpu_custom_call.1} parent=5 // pred_fallthru
      _
    %p799 = scmp.le.s32.totalorder 2, %s11
    // Predicated region
    $region45: #{tpu_custom_call.1} parent=5 // pred_check
      %p800 = pneg %p799
    $region46: #{tpu_custom_call.1} parent=5 // pred_check_branch
      %802 = sbr.rel (%p800) target = $region48
    $region47: #{tpu_custom_call.1} parent=5 // pred_region
      %s803 = ssub.s32 %s11, 2
      // Predicated region
      $region49: #{tpu_custom_call.1} parent=47 // pred_check
        %p804 = pneg %p180
      $region50: #{tpu_custom_call.1} parent=47 // pred_check_branch
        %806 = sbr.rel (%p804) target = $region52
      $region51: #{tpu_custom_call.1} parent=47 // pred_region
        %p807 = scmp.lt.s32.totalorder %s22, 1
        %s808 = scalar_select %p807, %s22, 1
        %p809 = scmp.lt.s32.totalorder %s23, 0
        %s810 = scalar_select %p809, %s23, 0
        %s811 = smul.addr %s808, 8
        %s812 = sadd.s32 %s810, %s811
        %s813 = smul.addr %s812, 8
        %s814 = scalar_lea.vmem %s5, %s813
      $region52: #{tpu_custom_call.1} parent=47 // pred_fallthru
        _
    $region48: #{tpu_custom_call.1} parent=5 // pred_fallthru
      _
  $region6: #{tpu_custom_call.1} parent=0 // loop_footer
    %s15 = sadd.s32 1, %s11
  $region7: #{tpu_custom_call.1} parent=0 // loop_footer_branch
    %10 = sbr.rel target = $region3
  $region8: #{tpu_custom_call.1} parent=0 // loop_exit
    _

</llo_original>
